<compile_context>
chip_gen: v5e
topology: v5e:2x2
jax: 0.10.0
libtpu: 0.0.40
codegen_flags: <defaults>
</compile_context>

<pallas_src>
import functools

import jax
import jax.numpy as jnp
from jax.experimental import pallas as pl
from jax.experimental.pallas import tpu as pltpu


def _spatial_attn_kernel(frames_ref, uh_ref, wa_ref, va_ref, out_ref,
                         m_sc, l_sc, *, n_valid, padded_n, tile_n):
    # frames_ref: (1, TILE_N, Fp)   per-(batch, N-tile) frame block (input dtype)
    # uh_ref:     (1, 1, Hp)        Uh + ba for this batch row (f32)
    # wa_ref:     (Fp, Hp)          bf16, grid-invariant (resident)
    # va_ref:     (1, Hp)           f32, grid-invariant (resident)
    # out_ref:    (1, 1, Fp)        f32 accumulator, resident across the N axis
    # m_sc, l_sc: (1, 1)            online-softmax running max / denominator
    n_idx = pl.program_id(1)
    n_last = pl.num_programs(1) - 1

    @pl.when(n_idx == 0)
    def _init():
        m_sc[...] = jnp.full((1, 1), -1e30, jnp.float32)
        l_sc[...] = jnp.zeros((1, 1), jnp.float32)
        out_ref[...] = jnp.zeros(out_ref.shape, out_ref.dtype)

    frames = frames_ref[0]                                     # (TILE_N, Fp)

    # Ws = frames @ Wa on the MXU: bf16 inputs, f32 accumulation.
    ws = jnp.dot(frames.astype(jnp.bfloat16), wa_ref[...],
                 preferred_element_type=jnp.float32)           # (TILE_N, Hp)

    # e = tanh(Ws + (Uh + ba)); ba is already folded into uh in the wrapper.
    e = jnp.tanh(ws + uh_ref[0])                               # (TILE_N, Hp)

    # Va projection: VPU multiply + lane reduce (no 1-lane-wide MXU output).
    logits = jnp.sum(e * va_ref[...], axis=-1, keepdims=True)  # (TILE_N, 1)

    # Mask rows that are pure N-padding (only emitted when padding exists).
    if n_valid < padded_n:
        row = n_idx * tile_n + jax.lax.broadcasted_iota(
            jnp.int32, (tile_n, 1), 0)
        logits = jnp.where(row < n_valid, logits, jnp.float32(-1e30))

    # Online-softmax update (flash-style).
    m_prev = m_sc[...]                                         # (1, 1)
    m_new = jnp.maximum(m_prev, jnp.max(logits, axis=0, keepdims=True))
    alpha = jnp.exp(m_prev - m_new)                            # (1, 1)
    p = jnp.exp(logits - m_new)                                # (TILE_N, 1)
    l_sc[...] = alpha * l_sc[...] + jnp.sum(p, axis=0, keepdims=True)
    m_sc[...] = m_new

    # Weighted-sum contribution for this tile: VPU multiply + sublane reduce
    # (FLOPs ~H x smaller than the Ws matmul, so VALU slack absorbs it and the
    # MXU stays free), accumulated into the resident f32 output block with the
    # flash rescale factor.
    contrib = jnp.sum(p * frames.astype(jnp.float32),
                      axis=0, keepdims=True)                   # (1, Fp)
    out_ref[...] = alpha * out_ref[...] + contrib[None]

    @pl.when(n_idx == n_last)
    def _finalize():
        # One reciprocal per batch row; approx EUP vrcp is well within the
        # bf16 path's tolerance.
        out_ref[...] = out_ref[...] * pl.reciprocal(l_sc[...], approx=True)


def _round_up(x, m):
    return (x + m - 1) // m * m


def _pick_tile_n(n, fp, hp, frame_itemsize, budget_bytes=8 << 20):
    # Per-row VMEM cost of one grid step: double-buffered frames tile plus the
    # f32 (TILE_N, Hp) ws/e temporaries.
    per_row = 2 * fp * frame_itemsize + 2 * hp * 4
    t = max(8, min(512, budget_bytes // per_row))
    t = min(t, _round_up(n, 8))
    return max(8, (t // 8) * 8)


def spatial_attention_module(hidden_frames, hidden_text, Wa, Ua, Va, ba,
                             *, feat_dim, tile_n=None):
    """hidden_frames: (B, T, feat_dim, input_size)
       hidden_text:   (B, 2*hidden_size)
       returns:       (B, input_size)"""
    B, T, FD, F = hidden_frames.shape
    assert FD == feat_dim
    N = T * FD
    H2, H = Ua.shape
    assert Wa.shape == (F, H)

    f32 = jnp.float32
    Fp = _round_up(F, 128)
    Hp = _round_up(H, 128)

    if tile_n is None:
        tile_n = _pick_tile_n(N, Fp, Hp, hidden_frames.dtype.itemsize)
    tile_n = max(8, (min(tile_n, _round_up(N, 8)) // 8) * 8)
    Np = _round_up(N, tile_n)
    n_tiles = Np // tile_n

    # Frames: reshape is free; pad only if needed (identity at production
    # sizes). The dtype is NOT rewritten here -- the bf16 cast for the MXU
    # happens per-tile inside the kernel, so the slab is streamed exactly once.
    frames = hidden_frames.reshape(B, N, F)
    if (Np, Fp) != (N, F):
        frames = jnp.pad(frames, ((0, 0), (0, Np - N), (0, Fp - F)))

    # Uh + ba: tiny XLA matmul hoisted out of the kernel (once per batch).
    uh = hidden_text.astype(f32) @ Ua.astype(f32) + ba.reshape(1, H).astype(f32)
    uh = uh.reshape(B, 1, H)
    if Hp != H:
        uh = jnp.pad(uh, ((0, 0), (0, 0), (0, Hp - H)))

    Wa_p = Wa.astype(jnp.bfloat16)          # bf16 MXU weight, f32 accumulation
    if (Fp, Hp) != (F, H):
        Wa_p = jnp.pad(Wa_p, ((0, Fp - F), (0, Hp - H)))
    Va_p = Va.reshape(1, H).astype(f32)
    if Hp != H:
        Va_p = jnp.pad(Va_p, ((0, 0), (0, Hp - H)))

    kernel = functools.partial(_spatial_attn_kernel,
                               n_valid=N, padded_n=Np, tile_n=tile_n)

    out = pl.pallas_call(
        kernel,
        out_shape=jax.ShapeDtypeStruct((B, 1, Fp), f32),
        grid_spec=pltpu.PrefetchScalarGridSpec(
            num_scalar_prefetch=0,
            grid=(B, n_tiles),
            in_specs=[
                pl.BlockSpec((1, tile_n, Fp), lambda b, n: (b, n, 0)),  # frames
                pl.BlockSpec((1, 1, Hp), lambda b, n: (b, 0, 0)),       # Uh+ba
                pl.BlockSpec((Fp, Hp), lambda b, n: (0, 0)),            # Wa (resident)
                pl.BlockSpec((1, Hp), lambda b, n: (0, 0)),             # Va (resident)
            ],
            out_specs=pl.BlockSpec((1, 1, Fp), lambda b, n: (b, 0, 0)),
            scratch_shapes=[pltpu.VMEM((1, 1), f32),   # m (running max)
                            pltpu.VMEM((1, 1), f32)],  # l (running denom)
        ),
        compiler_params=pltpu.CompilerParams(
            dimension_semantics=("parallel", "arbitrary"),
            vmem_limit_bytes=32 * 1024 * 1024,
        ),
    )(frames, uh, Wa_p, Va_p)

    # TODO(synk): drop_keep_prob_image_embed_t dropout is identity here (eval
    # mode); training-mode dropout would need pltpu.prng_seed/prng_random_bits.
    return out[:, 0, :F]


def _reference(hidden_frames, hidden_text, Wa, Ua, Va, ba):
    B, T, FD, F = hidden_frames.shape
    frames = hidden_frames.reshape(B, T * FD, F)
    Uh = hidden_text @ Ua                                  # (B, H)
    Uh = Uh[:, None, :]                                    # (B, 1, H)
    Ws = frames @ Wa                                       # (B, N, H)
    att = jnp.tanh(Ws + Uh + ba) @ Va                      # (B, N)
    att = jax.nn.softmax(att, axis=1)[:, :, None]          # (B, N, 1)
    return jnp.sum(att * frames, axis=1)                   # (B, F)


if __name__ == "__main__":
    # Small shapes consistent with the module's forward:
    #   input_size=32, hidden_size=32, feat_dim=4, T=2, batch=2
    B, T, FEAT_DIM, INPUT_SIZE, HIDDEN = 2, 2, 4, 32, 32

    key = jax.random.PRNGKey(0)
    k1, k2, k3, k4, k5 = jax.random.split(key, 5)

    # Deterministic parameter init matching init_weights(): N(0, 0.01), ba = 0.
    Wa = 0.01 * jax.random.normal(k1, (INPUT_SIZE, HIDDEN), jnp.float32)
    Ua = 0.01 * jax.random.normal(k2, (2 * HIDDEN, HIDDEN), jnp.float32)
    Va = 0.01 * jax.random.normal(k3, (HIDDEN,), jnp.float32)
    ba = jnp.zeros((1, 1, HIDDEN), jnp.float32)

    hidden_frames = jax.random.normal(
        k4, (B, T, FEAT_DIM, INPUT_SIZE), jnp.float32)
    hidden_text = jax.random.normal(k5, (B, 2 * HIDDEN), jnp.float32)

    fn = jax.jit(functools.partial(spatial_attention_module, feat_dim=FEAT_DIM))
    out = jax.block_until_ready(fn(hidden_frames, hidden_text, Wa, Ua, Va, ba))

    ref = _reference(hidden_frames, hidden_text, Wa, Ua, Va, ba)
    assert out.shape == (B, INPUT_SIZE)
    # bf16 MXU inputs with f32 accumulation -> relaxed tolerance (~1e-3 typical).
    assert jnp.allclose(out, ref, atol=1e-2, rtol=1e-2), "mismatch vs reference"

    print("KERNEL_OK")
</pallas_src>

<mosaic_0001>
module attributes {stable_mosaic.version = 11 : i64} {
  func.func @_spatial_attn_kernel(%arg0: i32, %arg1: i32, %arg2: memref<1x8x128xf32, #tpu.memory_space<vmem>>, %arg3: memref<1x1x128xf32, #tpu.memory_space<vmem>>, %arg4: memref<128x128xbf16, #tpu.memory_space<vmem>>, %arg5: memref<1x128xf32, #tpu.memory_space<vmem>>, %arg6: memref<1x1x128xf32, #tpu.memory_space<vmem>>, %arg7: memref<1x1xf32, #tpu.memory_space<vmem>>, %arg8: memref<1x1xf32, #tpu.memory_space<vmem>>) attributes {dimension_semantics = [#tpu.dimension_semantics<parallel>, #tpu.dimension_semantics<arbitrary>], iteration_bounds = array<i64: 2, 1>, scalar_prefetch = 0 : i64, scratch_operands = 2 : i64, tpu.core_type = #tpu.core_type<tc>, window_params = [{transform_indices = @transform_0, window_bounds = array<i64: 1, 8, 128>}, {transform_indices = @transform_1, window_bounds = array<i64: 1, 1, 128>}, {pipeline_mode = #tpu.pipeline_mode<synchronous>, transform_indices = @transform_2, window_bounds = array<i64: 128, 128>}, {pipeline_mode = #tpu.pipeline_mode<synchronous>, transform_indices = @transform_3, window_bounds = array<i64: 1, 128>}, {transform_indices = @transform_4, window_bounds = array<i64: 1, 1, 128>}]} {
    %c0_i32 = arith.constant 0 : i32
    %0 = arith.cmpi eq, %arg1, %c0_i32 : i32
    %1 = arith.extui %0 : i1 to i32
    %c0_i32_0 = arith.constant 0 : i32
    %2 = arith.cmpi ne, %1, %c0_i32_0 : i32
    scf.if %2 {
      %cst_30 = arith.constant -1.000000e+30 : f32
      %48 = vector.broadcast %cst_30 : f32 to vector<1x1xf32>
      %c0_31 = arith.constant 0 : index
      %c0_32 = arith.constant 0 : index
      %49 = vector.load %arg7[%c0_31, %c0_32] : memref<1x1xf32, #tpu.memory_space<vmem>>, vector<1x1xf32>
      tpu.vector_store %arg7[%c0_31, %c0_32], %48 {strides = array<i32>} : memref<1x1xf32, #tpu.memory_space<vmem>>, vector<1x1xf32>,
      %cst_33 = arith.constant 0.000000e+00 : f32
      %50 = vector.broadcast %cst_33 : f32 to vector<1x1xf32>
      %c0_34 = arith.constant 0 : index
      %c0_35 = arith.constant 0 : index
      %51 = vector.load %arg8[%c0_34, %c0_35] : memref<1x1xf32, #tpu.memory_space<vmem>>, vector<1x1xf32>
      tpu.vector_store %arg8[%c0_34, %c0_35], %50 {strides = array<i32>} : memref<1x1xf32, #tpu.memory_space<vmem>>, vector<1x1xf32>,
      %cst_36 = arith.constant 0.000000e+00 : f32
      %52 = vector.broadcast %cst_36 : f32 to vector<1x1x128xf32>
      %c0_37 = arith.constant 0 : index
      %c0_38 = arith.constant 0 : index
      %c0_39 = arith.constant 0 : index
      %53 = vector.load %arg6[%c0_37, %c0_38, %c0_39] : memref<1x1x128xf32, #tpu.memory_space<vmem>>, vector<1x1x128xf32>
      tpu.vector_store %arg6[%c0_37, %c0_38, %c0_39], %52 {strides = array<i32>} : memref<1x1x128xf32, #tpu.memory_space<vmem>>, vector<1x1x128xf32>,
    } else {
    }
    %c0 = arith.constant 0 : index
    %c0_1 = arith.constant 0 : index
    %c0_2 = arith.constant 0 : index
    %3 = vector.load %arg2[%c0, %c0_1, %c0_2] : memref<1x8x128xf32, #tpu.memory_space<vmem>>, vector<1x8x128xf32>
    %4 = vector.shape_cast %3 : vector<1x8x128xf32> to vector<8x128xf32>
    %5 = arith.truncf %4 : vector<8x128xf32> to vector<8x128xbf16>
    %c0_3 = arith.constant 0 : index
    %c0_4 = arith.constant 0 : index
    %6 = vector.load %arg4[%c0_3, %c0_4] : memref<128x128xbf16, #tpu.memory_space<vmem>>, vector<128x128xbf16>
    %cst = arith.constant dense<0.000000e+00> : vector<8x128xf32>
    %7 = tpu.matmul %5, %6, %cst {dimension_numbers = #tpu.dot_dimension_numbers<[1], [0], [0], [1], [0, 0, 1, 1], [], []>} : vector<8x128xbf16>, vector<128x128xbf16>, vector<8x128xf32> -> vector<8x128xf32>
    %c0_5 = arith.constant 0 : index
    %c0_6 = arith.constant 0 : index
    %c0_7 = arith.constant 0 : index
    %8 = vector.load %arg3[%c0_5, %c0_6, %c0_7] : memref<1x1x128xf32, #tpu.memory_space<vmem>>, vector<1x1x128xf32>
    %9 = vector.shape_cast %8 : vector<1x1x128xf32> to vector<1x128xf32>
    %10 = vector.broadcast %9 : vector<1x128xf32> to vector<8x128xf32>
    %11 = arith.addf %7, %10 : vector<8x128xf32>
    %12 = math.tanh %11 : vector<8x128xf32>
    %c0_8 = arith.constant 0 : index
    %c0_9 = arith.constant 0 : index
    %13 = vector.load %arg5[%c0_8, %c0_9] : memref<1x128xf32, #tpu.memory_space<vmem>>, vector<1x128xf32>
    %14 = vector.broadcast %13 : vector<1x128xf32> to vector<8x128xf32>
    %15 = arith.mulf %12, %14 : vector<8x128xf32>
    %cst_10 = arith.constant dense<0.000000e+00> : vector<8xf32>
    %16 = vector.multi_reduction <add>, %15, %cst_10 [1] : vector<8x128xf32> to vector<8xf32>
    %17 = vector.shape_cast %16 : vector<8xf32> to vector<8x1xf32>
    %c0_11 = arith.constant 0 : index
    %c0_12 = arith.constant 0 : index
    %18 = vector.load %arg7[%c0_11, %c0_12] : memref<1x1xf32, #tpu.memory_space<vmem>>, vector<1x1xf32>
    %cst_13 = arith.constant dense<0xFF800000> : vector<1xf32>
    %19 = vector.multi_reduction <maximumf>, %17, %cst_13 [0] : vector<8x1xf32> to vector<1xf32>
    %20 = vector.shape_cast %19 : vector<1xf32> to vector<1x1xf32>
    %21 = arith.maximumf %18, %20 : vector<1x1xf32>
    %22 = arith.subf %18, %21 : vector<1x1xf32>
    %23 = math.exp %22 : vector<1x1xf32>
    %24 = vector.broadcast %21 : vector<1x1xf32> to vector<8x1xf32>
    %25 = arith.subf %17, %24 : vector<8x1xf32>
    %26 = math.exp %25 : vector<8x1xf32>
    %c0_14 = arith.constant 0 : index
    %c0_15 = arith.constant 0 : index
    %27 = vector.load %arg8[%c0_14, %c0_15] : memref<1x1xf32, #tpu.memory_space<vmem>>, vector<1x1xf32>
    %28 = arith.mulf %23, %27 : vector<1x1xf32>
    %cst_16 = arith.constant dense<0.000000e+00> : vector<1xf32>
    %29 = vector.multi_reduction <add>, %26, %cst_16 [0] : vector<8x1xf32> to vector<1xf32>
    %30 = vector.shape_cast %29 : vector<1xf32> to vector<1x1xf32>
    %31 = arith.addf %28, %30 : vector<1x1xf32>
    %c0_17 = arith.constant 0 : index
    %c0_18 = arith.constant 0 : index
    %32 = vector.load %arg8[%c0_17, %c0_18] : memref<1x1xf32, #tpu.memory_space<vmem>>, vector<1x1xf32>
    tpu.vector_store %arg8[%c0_17, %c0_18], %31 {strides = array<i32>} : memref<1x1xf32, #tpu.memory_space<vmem>>, vector<1x1xf32>,
    %c0_19 = arith.constant 0 : index
    %c0_20 = arith.constant 0 : index
    %33 = vector.load %arg7[%c0_19, %c0_20] : memref<1x1xf32, #tpu.memory_space<vmem>>, vector<1x1xf32>
    tpu.vector_store %arg7[%c0_19, %c0_20], %21 {strides = array<i32>} : memref<1x1xf32, #tpu.memory_space<vmem>>, vector<1x1xf32>,
    %34 = vector.broadcast %26 : vector<8x1xf32> to vector<8x128xf32>
    %35 = arith.mulf %34, %4 : vector<8x128xf32>
    %cst_21 = arith.constant dense<0.000000e+00> : vector<128xf32>
    %36 = vector.multi_reduction <add>, %35, %cst_21 [0] : vector<8x128xf32> to vector<128xf32>
    %37 = vector.shape_cast %36 : vector<128xf32> to vector<1x128xf32>
    %c0_22 = arith.constant 0 : index
    %c0_23 = arith.constant 0 : index
    %c0_24 = arith.constant 0 : index
    %38 = vector.load %arg6[%c0_22, %c0_23, %c0_24] : memref<1x1x128xf32, #tpu.memory_space<vmem>>, vector<1x1x128xf32>
    %39 = vector.shape_cast %23 : vector<1x1xf32> to vector<1x1x1xf32>
    %40 = vector.broadcast %39 : vector<1x1x1xf32> to vector<1x1x128xf32>
    %41 = arith.mulf %40, %38 : vector<1x1x128xf32>
    %42 = vector.shape_cast %37 : vector<1x128xf32> to vector<1x1x128xf32>
    %43 = arith.addf %41, %42 : vector<1x1x128xf32>
    %c0_25 = arith.constant 0 : index
    %c0_26 = arith.constant 0 : index
    %c0_27 = arith.constant 0 : index
    %44 = vector.load %arg6[%c0_25, %c0_26, %c0_27] : memref<1x1x128xf32, #tpu.memory_space<vmem>>, vector<1x1x128xf32>
    tpu.vector_store %arg6[%c0_25, %c0_26, %c0_27], %43 {strides = array<i32>} : memref<1x1x128xf32, #tpu.memory_space<vmem>>, vector<1x1x128xf32>,
    %c0_i32_28 = arith.constant 0 : i32
    %45 = arith.cmpi eq, %arg1, %c0_i32_28 : i32
    %46 = arith.extui %45 : i1 to i32
    %c0_i32_29 = arith.constant 0 : i32
    %47 = arith.cmpi ne, %46, %c0_i32_29 : i32
    scf.if %47 {
      %c0_30 = arith.constant 0 : index
      %c0_31 = arith.constant 0 : index
      %c0_32 = arith.constant 0 : index
      %48 = vector.load %arg6[%c0_30, %c0_31, %c0_32] : memref<1x1x128xf32, #tpu.memory_space<vmem>>, vector<1x1x128xf32>
      %c0_33 = arith.constant 0 : index
      %c0_34 = arith.constant 0 : index
      %49 = vector.load %arg8[%c0_33, %c0_34] : memref<1x1xf32, #tpu.memory_space<vmem>>, vector<1x1xf32>
      %50 = tpu.reciprocal %49 {approx = true} : vector<1x1xf32> -> vector<1x1xf32>
      %51 = vector.shape_cast %50 : vector<1x1xf32> to vector<1x1x1xf32>
      %52 = vector.broadcast %51 : vector<1x1x1xf32> to vector<1x1x128xf32>
      %53 = arith.mulf %48, %52 : vector<1x1x128xf32>
      %c0_35 = arith.constant 0 : index
      %c0_36 = arith.constant 0 : index
      %c0_37 = arith.constant 0 : index
      %54 = vector.load %arg6[%c0_35, %c0_36, %c0_37] : memref<1x1x128xf32, #tpu.memory_space<vmem>>, vector<1x1x128xf32>
      tpu.vector_store %arg6[%c0_35, %c0_36, %c0_37], %53 {strides = array<i32>} : memref<1x1x128xf32, #tpu.memory_space<vmem>>, vector<1x1x128xf32>,
    } else {
    }
    return
  }
  func.func @transform_0(%arg0: i32, %arg1: i32) -> (i32, i32, i32) {
    %c0_i32 = arith.constant 0 : i32
    %c0_i32_0 = arith.constant 0 : i32
    return %arg0, %arg1, %c0_i32 : i32, i32, i32
  }
  func.func @transform_1(%arg0: i32, %arg1: i32) -> (i32, i32, i32) {
    %c0_i32 = arith.constant 0 : i32
    %c0_i32_0 = arith.constant 0 : i32
    %c0_i32_1 = arith.constant 0 : i32
    return %arg0, %c0_i32, %c0_i32_0 : i32, i32, i32
  }
  func.func @transform_2(%arg0: i32, %arg1: i32) -> (i32, i32) {
    %c0_i32 = arith.constant 0 : i32
    %c0_i32_0 = arith.constant 0 : i32
    %c0_i32_1 = arith.constant 0 : i32
    return %c0_i32, %c0_i32_0 : i32, i32
  }
  func.func @transform_3(%arg0: i32, %arg1: i32) -> (i32, i32) {
    %c0_i32 = arith.constant 0 : i32
    %c0_i32_0 = arith.constant 0 : i32
    %c0_i32_1 = arith.constant 0 : i32
    return %c0_i32, %c0_i32_0 : i32, i32
  }
  func.func @transform_4(%arg0: i32, %arg1: i32) -> (i32, i32, i32) {
    %c0_i32 = arith.constant 0 : i32
    %c0_i32_0 = arith.constant 0 : i32
    %c0_i32_1 = arith.constant 0 : i32
    return %arg0, %c0_i32, %c0_i32_0 : i32, i32, i32
  }
}

</mosaic_0001>

<llo_original>
// kernel: spatial_attention_module.1
$region0: #{spatial_attention_module.1}
  #allocation0 [shape = 'u32[]', space=smem, size = 0x4, offset = 0x4, fixed_abs, tag = 'smem constant byte address 0x4 - core index']
  #allocation1 [shape = 'u32[72,128]{1,0:T(1,128)}', space=vmem, size = 0x9000, scoped, tag = 'internal scratch']
  #allocation2 [shape = 'f32[1,1]{1,0:T(1,128)}', space=vmem, size = 0x200, scoped, tag = 'scratch operand']
  #allocation3 [shape = 'f32[1,1]{1,0:T(1,128)}', space=vmem, size = 0x200, scoped, tag = 'scratch operand']
  %s0 = inlined_call_operand.vmem [shape: f32[2,8,128], index: 0, kind: input, shape index: {}]
  %s1 = inlined_call_operand.vmem [shape: f32[2,1,128], index: 1, kind: input, shape index: {}]
  %s2 = inlined_call_operand.vmem [shape: bf16[128,128], index: 2, kind: input, shape index: {}]
  %s3 = inlined_call_operand.vmem [shape: f32[1,128], index: 3, kind: input, shape index: {}]
  %s4 = inlined_call_operand.hbm [shape: f32[2,1,128], index: 4, kind: output, shape index: {}]
  %s5 = sld [smem:[#allocation0]]
  $region57: #{spatial_attention_module.1} parent=0
    _
  %s7 = ssub.s32 1, %s5
  %s8 = scalar_select 0, %s7, %s5
  $region1: #{spatial_attention_module.1} parent=0
    #allocation4 [shape = 'u8[1024]{0}', space=vmem, size = 0x400, scoped, tag = 'output window, operand 0']
    #allocation5 [shape = 's32[2]{0}', space=sflag, size = 0x8, scoped, tag = 'scoped memory for spatial_attention_module.1']
    %9 = vsyncpa [#allocation5], 0
    %s10 = scalar_lea.sflag [#allocation5], 1
    %11 = vsyncpa %s10, 0
    loop: start=0, step=1, limit=4
    $region2: #{spatial_attention_module.1} parent=1 // loop_pre_header
      _
    $region3: #{spatial_attention_module.1} parent=1 // loop_header
      %s13 = sphi 0, %s17
      %p14 = scmp.ge.s32.totalorder %s13, 4
      %s20 = sphi 0, %s32
      %s21 = sphi 0, %s28
      %s22 = sphi 0, %s20
      %s23 = sphi 0, %s21
      %s24 = sphi 0, %s22
      %s25 = sphi 0, %s23
      %s37 = sphi 0, %s39
      %s40 = sphi 0, %s37
      %s41 = sphi 0, %s40
      %s57 = sphi 0, %s41
      %s63 = sphi 0, %s65
      %s66 = sphi 0, %s63
      %s67 = sphi 0, %s66
      %s83 = sphi 0, %s67
      %s87 = sphi 0, %s87
      %s89 = sphi 0, %s87
      %s90 = sphi 0, %s89
      %s104 = sphi 0, %s90
      %s108 = sphi 0, %s108
      %s110 = sphi 0, %s108
      %s111 = sphi 0, %s110
      %s125 = sphi 0, %s111
      %s131 = sphi 0, %s133
      %s134 = sphi 0, %s131
      %s135 = sphi 0, %s134
      %s151 = sphi 0, %s135
    $region4: #{spatial_attention_module.1} parent=1 // loop_header_branch
      %16 = sbr.rel (%p14) target = $region8
    $region5: #{spatial_attention_module.1} parent=1 // loop_body
      %s18 = ssub.s32 %s13, 1
      %s19 = ssub.s32 %s13, 2
      %s26 = sadd.s32 1, %s21
      %p27 = scmp.ge.s32.totalorder %s26, 1
      %s28 = scalar_select %p27, 0, %s26
      %s29 = sadd.s32 1, %s20
      %s30 = scalar_select %p27, %s29, %s20
      %p31 = scmp.ge.s32.totalorder %s30, 2
      %s32 = scalar_select %p31, 0, %s30
      %s33 = ssub.s32 %s20, %s32
      %s34 = ssub.s32 %s21, %s28
      %s35 = sor.u32 %s33, %s34
      %p36 = scmp.eq.s32.totalorder %s35, 0
      %s38 = sadd.s32 %s37, 1
      %s39 = scalar_select %p36, %s37, %s38
      %p42 = pneg %p36
      %p43 = scmp.eq.s32.totalorder %s13, 1
      %p44 = por %p42, %p43
      %p45 = scmp.ne.s32.totalorder %s37, %s40
      %p46 = scmp.eq.s32.totalorder %s13, 0
      %p47 = por %p45, %p46
      %p48 = scmp.ne.s32.totalorder %s37, %s40
      %p49 = scmp.eq.s32.totalorder %s18, 1
      %p50 = por %p48, %p49
      %p51 = scmp.ne.s32.totalorder %s40, %s41
      %p52 = scmp.eq.s32.totalorder %s18, 0
      %p53 = por %p51, %p52
      %p54 = scmp.ne.s32.totalorder %s40, %s41
      %p55 = scmp.eq.s32.totalorder %s19, 1
      %p56 = por %p54, %p55
      %p58 = scmp.ne.s32.totalorder %s41, %s57
      %p59 = scmp.eq.s32.totalorder %s19, 0
      %p60 = por %p58, %p59
      %s61 = ssub.s32 %s20, %s32
      %p62 = scmp.eq.s32.totalorder %s61, 0
      %s64 = sadd.s32 %s63, 1
      %s65 = scalar_select %p62, %s63, %s64
      %p68 = pneg %p62
      %p69 = scmp.eq.s32.totalorder %s13, 1
      %p70 = por %p68, %p69
      %p71 = scmp.ne.s32.totalorder %s63, %s66
      %p72 = scmp.eq.s32.totalorder %s13, 0
      %p73 = por %p71, %p72
      %p74 = scmp.ne.s32.totalorder %s63, %s66
      %p75 = scmp.eq.s32.totalorder %s18, 1
      %p76 = por %p74, %p75
      %p77 = scmp.ne.s32.totalorder %s66, %s67
      %p78 = scmp.eq.s32.totalorder %s18, 0
      %p79 = por %p77, %p78
      %p80 = scmp.ne.s32.totalorder %s66, %s67
      %p81 = scmp.eq.s32.totalorder %s19, 1
      %p82 = por %p80, %p81
      %p84 = scmp.ne.s32.totalorder %s67, %s83
      %p85 = scmp.eq.s32.totalorder %s19, 0
      %p86 = por %p84, %p85
      %s88 = sadd.s32 %s87, 1
      %p91 = scmp.eq.s32.totalorder %s13, 1
      %p92 = scmp.ne.s32.totalorder %s87, %s89
      %p93 = scmp.eq.s32.totalorder %s13, 0
      %p94 = por %p92, %p93
      %p95 = scmp.ne.s32.totalorder %s87, %s89
      %p96 = scmp.eq.s32.totalorder %s18, 1
      %p97 = por %p95, %p96
      %p98 = scmp.ne.s32.totalorder %s89, %s90
      %p99 = scmp.eq.s32.totalorder %s18, 0
      %p100 = por %p98, %p99
      %p101 = scmp.ne.s32.totalorder %s89, %s90
      %p102 = scmp.eq.s32.totalorder %s19, 1
      %p103 = por %p101, %p102
      %p105 = scmp.ne.s32.totalorder %s90, %s104
      %p106 = scmp.eq.s32.totalorder %s19, 0
      %p107 = por %p105, %p106
      %s109 = sadd.s32 %s108, 1
      %p112 = scmp.eq.s32.totalorder %s13, 1
      %p113 = scmp.ne.s32.totalorder %s108, %s110
      %p114 = scmp.eq.s32.totalorder %s13, 0
      %p115 = por %p113, %p114
      %p116 = scmp.ne.s32.totalorder %s108, %s110
      %p117 = scmp.eq.s32.totalorder %s18, 1
      %p118 = por %p116, %p117
      %p119 = scmp.ne.s32.totalorder %s110, %s111
      %p120 = scmp.eq.s32.totalorder %s18, 0
      %p121 = por %p119, %p120
      %p122 = scmp.ne.s32.totalorder %s110, %s111
      %p123 = scmp.eq.s32.totalorder %s19, 1
      %p124 = por %p122, %p123
      %p126 = scmp.ne.s32.totalorder %s111, %s125
      %p127 = scmp.eq.s32.totalorder %s19, 0
      %p128 = por %p126, %p127
      %s129 = ssub.s32 %s20, %s32
      %p130 = scmp.eq.s32.totalorder %s129, 0
      %s132 = sadd.s32 %s131, 1
      %s133 = scalar_select %p130, %s131, %s132
      %p136 = pneg %p130
      %p137 = scmp.eq.s32.totalorder %s13, 1
      %p138 = por %p136, %p137
      %p139 = scmp.ne.s32.totalorder %s131, %s134
      %p140 = scmp.eq.s32.totalorder %s13, 0
      %p141 = por %p139, %p140
      %p142 = scmp.ne.s32.totalorder %s131, %s134
      %p143 = scmp.eq.s32.totalorder %s18, 1
      %p144 = por %p142, %p143
      %p145 = scmp.ne.s32.totalorder %s134, %s135
      %p146 = scmp.eq.s32.totalorder %s18, 0
      %p147 = por %p145, %p146
      %p148 = scmp.ne.s32.totalorder %s134, %s135
      %p149 = scmp.eq.s32.totalorder %s19, 1
      %p150 = por %p148, %p149
      %p152 = scmp.ne.s32.totalorder %s135, %s151
      %p153 = scmp.eq.s32.totalorder %s19, 0
      %p154 = por %p152, %p153
      %p155 = scmp.le.s32.totalorder 1, %s13
      %p156 = scmp.lt.s32.totalorder %s13, 3
      %p157 = pnand %p155, %p156
      %p158 = pneg %p157
      // Predicated region
      $region9: #{spatial_attention_module.1} parent=5 // pred_check
        _
      $region10: #{spatial_attention_module.1} parent=5 // pred_check_branch
        %160 = sbr.rel (%p157) target = $region12
      $region11: #{spatial_attention_module.1} parent=5 // pred_region
        %s161 = ssub.s32 %s13, 1
        // Predicated region
        $region13: #{spatial_attention_module.1} parent=11 // pred_check
          %p162 = pneg %p100
        $region14: #{spatial_attention_module.1} parent=11 // pred_check_branch
          %164 = sbr.rel (%p162) target = $region16
        $region15: #{spatial_attention_module.1} parent=11 // pred_region
          _
        $region16: #{spatial_attention_module.1} parent=11 // pred_fallthru
          _
        // Predicated region
        $region17: #{spatial_attention_module.1} parent=11 // pred_check
          %p165 = pneg %p121
        $region18: #{spatial_attention_module.1} parent=11 // pred_check_branch
          %167 = sbr.rel (%p165) target = $region20
        $region19: #{spatial_attention_module.1} parent=11 // pred_region
          _
        $region20: #{spatial_attention_module.1} parent=11 // pred_fallthru
          _
      $region12: #{spatial_attention_module.1} parent=5 // pred_fallthru
        _
      %p168 = scmp.lt.s32.totalorder %s13, 2
      // Predicated region
      $region21: #{spatial_attention_module.1} parent=5 // pred_check
        %p169 = pneg %p168
      $region22: #{spatial_attention_module.1} parent=5 // pred_check_branch
        %171 = sbr.rel (%p169) target = $region24
      $region23: #{spatial_attention_module.1} parent=5 // pred_region
        // Predicated region
        $region25: #{spatial_attention_module.1} parent=23 // pred_check
          %p172 = pneg %p47
        $region26: #{spatial_attention_module.1} parent=23 // pred_check_branch
          %174 = sbr.rel (%p172) target = $region28
        $region27: #{spatial_attention_module.1} parent=23 // pred_region
          %p175 = scmp.lt.s32.totalorder %s20, 1
          %s176 = scalar_select %p175, %s20, 1
          %p177 = scmp.lt.s32.totalorder %s21, 0
          %s178 = scalar_select %p177, %s21, 0
          %s179 = sadd.s32 %s178, %s176
          %s180 = smul.addr %s179, 8
          %s181 = scalar_lea.vmem %s0, %s180
        $region28: #{spatial_attention_module.1} parent=23 // pred_fallthru
          _
        // Predicated region
        $region29: #{spatial_attention_module.1} parent=23 // pred_check
          %p182 = pneg %p73
        $region30: #{spatial_attention_module.1} parent=23 // pred_check_branch
          %184 = sbr.rel (%p182) target = $region32
        $region31: #{spatial_attention_module.1} parent=23 // pred_region
          %p185 = scmp.lt.s32.totalorder %s20, 1
          %s186 = scalar_select %p185, %s20, 1
          %s187 = scalar_lea.vmem %s1, %s186
        $region32: #{spatial_attention_module.1} parent=23 // pred_fallthru
          _
      $region24: #{spatial_attention_module.1} parent=5 // pred_fallthru
        _
      %p188 = scmp.le.s32.totalorder 1, %s13
      %p189 = scmp.lt.s32.totalorder %s13, 3
      %p190 = pnand %p188, %p189
      %p191 = pneg %p190
      // Predicated region
      $region33: #{spatial_attention_module.1} parent=5 // pred_check
        _
      $region34: #{spatial_attention_module.1} parent=5 // pred_check_branch
        %193 = sbr.rel (%p190) target = $region36
      $region35: #{spatial_attention_module.1} parent=5 // pred_region
        %s194 = ssub.s32 %s13, 1
        %p195 = scmp.lt.s32.totalorder %s22, 1
        %s196 = scalar_select %p195, %s22, 1
        %p197 = scmp.lt.s32.totalorder %s23, 0
        %s198 = scalar_select %p197, %s23, 0
        %s199 = sadd.s32 %s198, %s196
        %s200 = smul.addr %s199, 8
        %s201 = scalar_lea.vmem %s0, %s200
        %p202 = pneg %p53
        %p203 = pneg %p50
        %p204 = scmp.lt.s32.totalorder %s22, 1
        %s205 = scalar_select %p204, %s22, 1
        %s206 = scalar_lea.vmem %s1, %s205
        %p207 = pneg %p79
        %p208 = pneg %p76
        %p209 = pneg %p100
        %p210 = pneg %p97
        %p211 = pneg %p121
        %p212 = pneg %p118
        %p213 = pneg %p147
        %p214 = pneg %p144
        %s215 = sand.u32 %s134, 1
        %s216 = scalar_lea.sflag [#allocation5], %s215
        %s217 = sand.u32 %s134, 1
        %s218 = scalar_lea.vmem [#allocation4], %s217
        %p219 = scmp.lt.s32.totalorder %s22, 1
        %s220 = scalar_select %p219, %s22, 1
        %p221 = scmp.lt.s32.totalorder %s23, 0
        %s222 = scalar_select %p221, %s23, 0
        %s223 = sadd.s32 %s222, %s220
        %s224 = smul.addr %s223, 8
        %s225 = scalar_lea.vmem %s0, %s224
        %p226 = scmp.lt.s32.totalorder %s22, 1
        %s227 = scalar_select %p226, %s22, 1
        %s228 = scalar_lea.vmem %s1, %s227
        %p229 = scmp.eq.s32.totalorder %s23, 0
        // Predicated region
        $region37: #{spatial_attention_module.1} parent=35 // pred_check
          %p230 = pneg %p229
        $region38: #{spatial_attention_module.1} parent=35 // pred_check_branch
          %232 = sbr.rel (%p230) target = $region40
        $region39: #{spatial_attention_module.1} parent=35 // pred_region
          %vm233 = vcmask 0
          %234 = vst.msk [vmem:[#allocation2] sm:$0x1] %vm233, -1e+30
          %235 = vst.msk [vmem:[#allocation3] sm:$0x1] %vm233, 0.0
          %236 = vst [vmem:[%s218] sm:$0x1] 0.0
        $region40: #{spatial_attention_module.1} parent=35 // pred_fallthru
          _
        %v237 = vld [vmem:[%s225] sm:$0xff]
        %v238 = vpack.c.bf16 %v237, %v237
        %v239 = vld [vmem:[%s2] sm:$0xf]
        %v240 = vld [vmem:[%s2 + $0x4] sm:$0xf]
        %v241 = vld [vmem:[%s2 + $0x8] sm:$0xf]
        %v242 = vld [vmem:[%s2 + $0xc] sm:$0xf]
        %v243 = vld [vmem:[%s2 + $0x10] sm:$0xf]
        %v244 = vld [vmem:[%s2 + $0x14] sm:$0xf]
        %v245 = vld [vmem:[%s2 + $0x18] sm:$0xf]
        %v246 = vld [vmem:[%s2 + $0x1c] sm:$0xf]
        %v247 = vld [vmem:[%s2 + $0x20] sm:$0xf]
        %v248 = vld [vmem:[%s2 + $0x24] sm:$0xf]
        %v249 = vld [vmem:[%s2 + $0x28] sm:$0xf]
        %v250 = vld [vmem:[%s2 + $0x2c] sm:$0xf]
        %v251 = vld [vmem:[%s2 + $0x30] sm:$0xf]
        %v252 = vld [vmem:[%s2 + $0x34] sm:$0xf]
        %v253 = vld [vmem:[%s2 + $0x38] sm:$0xf]
        %v254 = vld [vmem:[%s2 + $0x3c] sm:$0xf]
        %v255 = vld [vmem:[%s228] sm:$0x1]
        %v257 = vperm.slane %v255, 0
        %v275 = vunpack.c.l.b16 %v239
        %v276 = vunpack.c.l.b16 %v240
        %v277 = vunpack.c.l.b16 %v241
        %v278 = vunpack.c.l.b16 %v242
        %v279 = vunpack.c.l.b16 %v243
        %v280 = vunpack.c.l.b16 %v244
        %v281 = vunpack.c.l.b16 %v245
        %v282 = vunpack.c.l.b16 %v246
        %v283 = vunpack.c.l.b16 %v247
        %v284 = vunpack.c.l.b16 %v248
        %v285 = vunpack.c.l.b16 %v249
        %v286 = vunpack.c.l.b16 %v250
        %v287 = vunpack.c.l.b16 %v251
        %v288 = vunpack.c.l.b16 %v252
        %v289 = vunpack.c.l.b16 %v253
        %v290 = vunpack.c.l.b16 %v254
        %v291 = vpack.c.b16 %v276, %v275
        %v292 = vpack.c.b16 %v278, %v277
        %v293 = vpack.c.b16 %v280, %v279
        %v294 = vpack.c.b16 %v282, %v281
        %v295 = vpack.c.b16 %v284, %v283
        %v296 = vpack.c.b16 %v286, %v285
        %v297 = vpack.c.b16 %v288, %v287
        %v298 = vpack.c.b16 %v290, %v289
        %307 = vmatpush.bf16.msra.mxu0 %v298
        %308 = vmatpush.bf16.msra.mxu0 %v297
        %309 = vmatpush.bf16.msra.mxu0 %v296
        %310 = vmatpush.bf16.msra.mxu0 %v295
        %311 = vmatpush.bf16.msra.mxu0 %v294
        %312 = vmatpush.bf16.msra.mxu0 %v293
        %313 = vmatpush.bf16.msra.mxu0 %v292
        %314 = vmatpush.bf16.msra.mxu0 %v291
        %315 = vmatmul.bf16.gmra.mxu0 %v238
        %v316 = vpop.f32.mrf.mxu0
        %v317 = vadd.f32 %v257, %v316
        %v318 = vpop.f32.mrf.mxu0
        %319 = vdwg.mxu0
        %v320 = vtanh.pop %v317
        %v321 = vld [vmem:[%s3] sm:$0x1]
        %v323 = vperm.slane %v321, 0
        %v325 = vmul.f32 %v320, %v323
        %326 = vadd.xlane.f32.xlu0 %v325
        %v327 = vpop.xlane.xlu0 %326
        %v328 = vld [vmem:[#allocation2] sm:$0x1]
        %v329 = vrot.slane %v327, 4
        %v330 = vmax.f32 %v327, %v329
        %v331 = vrot.slane %v330, 2
        %v332 = vmax.f32 %v330, %v331
        %v333 = vrot.slane %v332, 1
        %v334 = vmax.f32 %v332, %v333
        %v335 = vmax.f32 %v328, %v334
        %v336 = vsub.f32 %v328, %v335
        %v337 = vmul.f32 %v336, 1.442695
        %v338 = vpow.pop %v337
        %v340 = vperm.slane %v335, 0
        %v342 = vsub.f32 %v327, %v340
        %v343 = vmul.f32 %v342, 1.442695
        %v344 = vpow.pop %v343
        %v345 = vld [vmem:[#allocation3] sm:$0x1]
        %v346 = vmul.f32 %v338, %v345
        %vm347 = vcmask 7168
        %v348 = vsel %vm347, %v344, 0.0
        %v349 = vrot.slane %v348, 4
        %v350 = vadd.f32 %v348, %v349
        %v351 = vrot.slane %v350, 2
        %v352 = vadd.f32 %v350, %v351
        %v353 = vrot.slane %v352, 1
        %v354 = vadd.f32 %v352, %v353
        %v355 = vadd.f32 %v346, %v354
        %vm356 = vcmask 0
        %357 = vst.msk [vmem:[#allocation3] sm:$0x1] %vm356, %v355
        %358 = vst.msk [vmem:[#allocation2] sm:$0x1] %vm356, %v335
        %360 = vset.pattern.permute.xlu0 0
        %361 = vperm.xlu0 %360, %v344
        %v362 = vpop.permute.xlu0 %361
        %v364 = vmul.f32 %v362, %v237
        %v365 = vrot.slane %v364, 4
        %v366 = vadd.f32 %v364, %v365
        %v367 = vrot.slane %v366, 2
        %v368 = vadd.f32 %v366, %v367
        %v369 = vrot.slane %v368, 1
        %v370 = vadd.f32 %v368, %v369
        %v371 = vld [vmem:[%s218] sm:$0x1]
        %373 = vset.pattern.permute.xlu0 0
        %374 = vperm.xlu0 %373, %v338
        %v375 = vpop.permute.xlu0 %374
        %v377 = vperm.slane %v375, 0
        %v378 = vmul.f32 %v377, %v371
        %v379 = vadd.f32 %v378, %v370
        %380 = vst [vmem:[%s218] sm:$0x1] %v379
        // Predicated region
        $region41: #{spatial_attention_module.1} parent=35 // pred_check
          %p381 = pneg %p229
        $region42: #{spatial_attention_module.1} parent=35 // pred_check_branch
          %383 = sbr.rel (%p381) target = $region44
        $region43: #{spatial_attention_module.1} parent=35 // pred_region
          %v384 = vld [vmem:[%s218] sm:$0x1]
          %v385 = vld [vmem:[#allocation3] sm:$0x1]
          %v386 = vrcp.pop %v385
          %388 = vset.pattern.permute.xlu0 0
          %389 = vperm.xlu0 %388, %v386
          %v390 = vpop.permute.xlu0 %389
          %v392 = vperm.slane %v390, 0
          %v393 = vmul.f32 %v384, %v392
          %394 = vst [vmem:[%s218] sm:$0x1] %v393
        $region44: #{spatial_attention_module.1} parent=35 // pred_fallthru
          _
        %s395 = sand.u32 %s134, 1
        %s396 = scalar_lea.sflag [#allocation5], %s395
        %s397 = sand.u32 %s134, 1
        %s398 = scalar_lea.vmem [#allocation4], %s397
        // Predicated region
        $region45: #{spatial_attention_module.1} parent=35 // pred_check
          %p399 = pneg %p144
        $region46: #{spatial_attention_module.1} parent=35 // pred_check_branch
          %401 = sbr.rel (%p399) target = $region48
        $region47: #{spatial_attention_module.1} parent=35 // pred_region
          %403 = vsyncadd %s396, 0
          %s404 = scalar_lea.hbm %s4, %s22
          %s406 = sshll.u32 %s398, 4
          %s407 = int_to_ptr.vmem [resolvable:$true] %s406
          %s408 = sshll.u32 %s404, 4
          %s409 = int_to_ptr.hbm [resolvable:$true] %s408
          %411 = dma.vmem_to_hbm [thread:$0]  %s407, 16, %s409, %s396
        $region48: #{spatial_attention_module.1} parent=35 // pred_fallthru
          _
      $region36: #{spatial_attention_module.1} parent=5 // pred_fallthru
        _
      %p412 = scmp.le.s32.totalorder 2, %s13
      // Predicated region
      $region49: #{spatial_attention_module.1} parent=5 // pred_check
        %p413 = pneg %p412
      $region50: #{spatial_attention_module.1} parent=5 // pred_check_branch
        %415 = sbr.rel (%p413) target = $region52
      $region51: #{spatial_attention_module.1} parent=5 // pred_region
        %s416 = ssub.s32 %s13, 2
        // Predicated region
        $region53: #{spatial_attention_module.1} parent=51 // pred_check
          %p417 = pneg %p150
        $region54: #{spatial_attention_module.1} parent=51 // pred_check_branch
          %419 = sbr.rel (%p417) target = $region56
        $region55: #{spatial_attention_module.1} parent=51 // pred_region
          %s420 = sand.u32 %s135, 1
          %s421 = scalar_lea.sflag [#allocation5], %s420
          %s422 = sand.u32 %s135, 1
          %s423 = scalar_lea.vmem [#allocation4], %s422
          %425 = dma.done %s421, 16
        $region56: #{spatial_attention_module.1} parent=51 // pred_fallthru
          _
      $region52: #{spatial_attention_module.1} parent=5 // pred_fallthru
        _
    $region6: #{spatial_attention_module.1} parent=1 // loop_footer
      %s17 = sadd.s32 1, %s13
    $region7: #{spatial_attention_module.1} parent=1 // loop_footer_branch
      %12 = sbr.rel target = $region3
    $region8: #{spatial_attention_module.1} parent=1 // loop_exit
      _
    %426 = vsyncpa [#allocation5], 1
    %s427 = scalar_lea.sflag [#allocation5], 1
    %428 = vsyncpa %s427, 1

</llo_original>
